<compile_context>
chip_gen: v7x
topology: tpu7x:2x2x1
jax: 0.10.0
libtpu: 0.0.40
codegen_flags: <defaults>
</compile_context>

<pallas_src>
import math
import jax
import jax.numpy as jnp
from jax.experimental import pallas as pl
from jax.experimental.pallas import tpu as pltpu


def highway_kernel(x_ref, w_ref, b_ref, o_ref):
    """x_ref: (TB, E) f32.  w_ref: (E, 2E) [proj | gate], possibly bf16.
    b_ref: (1, 2E) f32.  o_ref: (TB, E)."""
    e = o_ref.shape[-1]
    x = x_ref[...]                        # f32, reused for the skip connection
    w = w_ref[...]
    lhs = x.astype(w.dtype) if w.dtype != x.dtype else x
    # Single fused GEMM: (TB, E) @ (E, 2E) -> (TB, 2E), f32 accumulation.
    y = jnp.dot(lhs, w, preferred_element_type=jnp.float32) + b_ref[...]
    proj = jnp.maximum(y[:, :e], 0.0)      # relu(x @ Wp^T + bp)
    gate = jax.nn.sigmoid(y[:, e:])        # sigmoid(x @ Wg^T + bg)
    # x_highway = gate*proj + (1-gate)*x  ==  x + gate*(proj - x)
    o_ref[...] = (x + gate * (proj - x)).astype(o_ref.dtype)


def prepare_highway_params(w_proj, b_proj, w_gate, b_gate, matmul_dtype=jnp.float32):
    """One-time prep (do this at init, not per forward call).

    w_*: (E, E) PyTorch Linear weights (out, in).  b_*: (E,).
    Returns (w_fused (E, 2E) in matmul_dtype, b_fused (1, 2E) f32).
    """
    wp_t = jnp.asarray(w_proj).T           # (in, out)
    wg_t = jnp.asarray(w_gate).T
    e = wp_t.shape[0]
    w_fused = jnp.concatenate([wp_t, wg_t], axis=1).astype(matmul_dtype)   # (E, 2E)
    b_fused = jnp.concatenate(
        [jnp.asarray(b_proj), jnp.asarray(b_gate)]
    ).reshape(1, 2 * e).astype(jnp.float32)
    return w_fused, b_fused


def _pick_block_rows(batch, e, requested, w_bytes):
    """Largest row-tile that keeps the pipelined footprint under ~24 MiB
    (headroom below the 32 MiB scoped-VMEM default; v7x physical is 64 MiB)."""
    budget = 24 << 20
    tb = min(batch, max(8, (requested // 8) * 8))

    def footprint(t):
        x_bufs = 2 * t * e * 4             # double-buffered input block (f32)
        o_bufs = 2 * t * e * 4             # double-buffered output block (f32)
        y_tmp = t * 2 * e * 4              # fused matmul result (f32)
        return x_bufs + o_bufs + y_tmp + 2 * w_bytes

    while tb > 8 and footprint(tb) > budget:
        tb = max(8, tb // 2)
    if tb >= batch:
        return batch                        # full-extent block is always legal
    return tb                               # multiple of 8 -> legal block dim


def highway_forward(x, w_fused, b_fused, *, block_rows=512):
    """x: (B, E) f32.  w_fused: (E, 2E).  b_fused: (1, 2E).  Returns (B, E)."""
    b, e = x.shape
    assert w_fused.shape == (e, 2 * e) and b_fused.shape == (1, 2 * e)

    tb = _pick_block_rows(b, e, block_rows, w_fused.size * w_fused.dtype.itemsize)
    grid = (pl.cdiv(b, tb),)

    return pl.pallas_call(
        highway_kernel,
        out_shape=jax.ShapeDtypeStruct((b, e), x.dtype),
        grid=grid,
        in_specs=[
            pl.BlockSpec((tb, e), lambda i: (i, 0)),        # x: tiled over batch
            pl.BlockSpec((e, 2 * e), lambda i: (0, 0)),     # fused weight: resident
            pl.BlockSpec((1, 2 * e), lambda i: (0, 0)),     # fused bias: resident
        ],
        out_specs=pl.BlockSpec((tb, e), lambda i: (i, 0)),
        compiler_params=pltpu.CompilerParams(
            dimension_semantics=("parallel",),
            vmem_limit_bytes=32 << 20,
        ),
    )(x, w_fused, b_fused)


def xavier_normal(key, shape):
    # nn.init.xavier_normal_ with gain=1: std = sqrt(2 / (fan_in + fan_out))
    fan_out, fan_in = shape
    std = math.sqrt(2.0 / (fan_in + fan_out))
    return std * jax.random.normal(key, shape, dtype=jnp.float32)


def linear_bias_init(key, fan_in, out_features):
    # PyTorch default Linear bias init: U(-1/sqrt(fan_in), 1/sqrt(fan_in))
    bound = 1.0 / math.sqrt(fan_in)
    return jax.random.uniform(
        key, (out_features,), minval=-bound, maxval=bound, dtype=jnp.float32
    )


if __name__ == "__main__":
    B, E = 64, 32  # batch_size, word_embed (f_embed) — small demo shapes
    key = jax.random.PRNGKey(0)
    kx, kwp, kbp, kwg, kbg = jax.random.split(key, 5)

    x = jax.random.normal(kx, (B, E), dtype=jnp.float32)
    w_proj = xavier_normal(kwp, (E, E))          # (out, in) like nn.Linear.weight
    b_proj = linear_bias_init(kbp, E, E)
    w_gate = xavier_normal(kwg, (E, E))
    b_gate = linear_bias_init(kbg, E, E)

    # Pure-JAX reference of the highway semantics.
    x_proj_ref = jnp.maximum(x @ w_proj.T + b_proj, 0.0)
    x_gate_ref = jax.nn.sigmoid(x @ w_gate.T + b_gate)
    ref = x_gate_ref * x_proj_ref + (1.0 - x_gate_ref) * x

    # f32 path; block_rows=16 forces a multi-step batch grid (grid=(4,)).
    w_f32, b_f32 = prepare_highway_params(w_proj, b_proj, w_gate, b_gate)
    out = jax.block_until_ready(highway_forward(x, w_f32, b_f32, block_rows=16))
    assert jnp.allclose(out, ref, atol=1e-5, rtol=1e-5), "f32 mismatch vs reference"

    # bf16 MXU-operand path (v6e/v7x fast path); elementwise stays f32.
    w_bf16, b_bf = prepare_highway_params(
        w_proj, b_proj, w_gate, b_gate, matmul_dtype=jnp.bfloat16
    )
    out_bf16 = jax.block_until_ready(highway_forward(x, w_bf16, b_bf))
    assert jnp.allclose(out_bf16, ref, atol=3e-2, rtol=3e-2), "bf16 mismatch vs reference"

    print("KERNEL_OK")
</pallas_src>

<mosaic_0001>
module attributes {stable_mosaic.version = 11 : i64} {
  func.func @highway_kernel(%arg0: i32, %arg1: memref<16x32xf32, #tpu.memory_space<vmem>>, %arg2: memref<32x64xf32, #tpu.memory_space<vmem>>, %arg3: memref<1x64xf32, #tpu.memory_space<vmem>>, %arg4: memref<16x32xf32, #tpu.memory_space<vmem>>) attributes {dimension_semantics = [#tpu.dimension_semantics<parallel>], iteration_bounds = array<i64: 4>, scalar_prefetch = 0 : i64, scratch_operands = 0 : i64, tpu.core_type = #tpu.core_type<tc>, window_params = [{transform_indices = @transform_0, window_bounds = array<i64: 16, 32>}, {pipeline_mode = #tpu.pipeline_mode<synchronous>, transform_indices = @transform_1, window_bounds = array<i64: 32, 64>}, {pipeline_mode = #tpu.pipeline_mode<synchronous>, transform_indices = @transform_2, window_bounds = array<i64: 1, 64>}, {transform_indices = @transform_3, window_bounds = array<i64: 16, 32>}]} {
    %c0 = arith.constant 0 : index
    %c0_0 = arith.constant 0 : index
    %0 = vector.load %arg1[%c0, %c0_0] : memref<16x32xf32, #tpu.memory_space<vmem>>, vector<16x32xf32>
    %c0_1 = arith.constant 0 : index
    %c0_2 = arith.constant 0 : index
    %1 = vector.load %arg2[%c0_1, %c0_2] : memref<32x64xf32, #tpu.memory_space<vmem>>, vector<32x64xf32>
    %cst = arith.constant dense<0.000000e+00> : vector<16x64xf32>
    %2 = tpu.matmul %0, %1, %cst {dimension_numbers = #tpu.dot_dimension_numbers<[1], [0], [0], [1], [0, 0, 1, 1], [], []>} : vector<16x32xf32>, vector<32x64xf32>, vector<16x64xf32> -> vector<16x64xf32>
    %c0_3 = arith.constant 0 : index
    %c0_4 = arith.constant 0 : index
    %3 = vector.load %arg3[%c0_3, %c0_4] : memref<1x64xf32, #tpu.memory_space<vmem>>, vector<1x64xf32>
    %4 = vector.broadcast %3 : vector<1x64xf32> to vector<16x64xf32>
    %5 = arith.addf %2, %4 : vector<16x64xf32>
    %6 = vector.extract_strided_slice %5 {offsets = [0, 0], sizes = [16, 32], strides = [1, 1]} : vector<16x64xf32> to vector<16x32xf32>
    %cst_5 = arith.constant 0.000000e+00 : f32
    %7 = vector.broadcast %cst_5 : f32 to vector<16x32xf32>
    %8 = arith.maximumf %6, %7 : vector<16x32xf32>
    %9 = vector.extract_strided_slice %5 {offsets = [0, 32], sizes = [16, 32], strides = [1, 1]} : vector<16x64xf32> to vector<16x32xf32>
    %10 = arith.negf %9 : vector<16x32xf32>
    %11 = math.exp %10 : vector<16x32xf32>
    %cst_6 = arith.constant 1.000000e+00 : f32
    %12 = vector.broadcast %cst_6 : f32 to vector<16x32xf32>
    %13 = arith.addf %12, %11 : vector<16x32xf32>
    %14 = arith.divf %12, %13 : vector<16x32xf32>
    %15 = arith.subf %8, %0 : vector<16x32xf32>
    %16 = arith.mulf %14, %15 : vector<16x32xf32>
    %17 = arith.addf %0, %16 : vector<16x32xf32>
    %c0_7 = arith.constant 0 : index
    %c0_8 = arith.constant 0 : index
    %18 = vector.load %arg4[%c0_7, %c0_8] : memref<16x32xf32, #tpu.memory_space<vmem>>, vector<16x32xf32>
    tpu.vector_store %arg4[%c0_7, %c0_8], %17 {strides = array<i32>} : memref<16x32xf32, #tpu.memory_space<vmem>>, vector<16x32xf32>,
    return
  }
  func.func @transform_0(%arg0: i32) -> (i32, i32) {
    %c0_i32 = arith.constant 0 : i32
    %c0_i32_0 = arith.constant 0 : i32
    return %arg0, %c0_i32 : i32, i32
  }
  func.func @transform_1(%arg0: i32) -> (i32, i32) {
    %c0_i32 = arith.constant 0 : i32
    %c0_i32_0 = arith.constant 0 : i32
    %c0_i32_1 = arith.constant 0 : i32
    return %c0_i32, %c0_i32_0 : i32, i32
  }
  func.func @transform_2(%arg0: i32) -> (i32, i32) {
    %c0_i32 = arith.constant 0 : i32
    %c0_i32_0 = arith.constant 0 : i32
    %c0_i32_1 = arith.constant 0 : i32
    return %c0_i32, %c0_i32_0 : i32, i32
  }
  func.func @transform_3(%arg0: i32) -> (i32, i32) {
    %c0_i32 = arith.constant 0 : i32
    %c0_i32_0 = arith.constant 0 : i32
    return %arg0, %c0_i32 : i32, i32
  }
}

</mosaic_0001>

<llo_original>
// kernel: tpu_custom_call.1
$region0: #{tpu_custom_call.1}
  #allocation0 [shape = 'u32[]', space=smem, size = 0x4, offset = 0x4, fixed_abs, tag = 'smem constant byte address 0x4 - core index']
  #allocation1 [shape = 'u32[144,128]{1,0:T(1,128)}', space=vmem, size = 0x12000, scoped, tag = 'internal scratch']
  %s0 = inlined_call_operand.vmem [shape: f32[64,32], index: 0, kind: input, shape index: {}]
  %s1 = inlined_call_operand.vmem [shape: f32[32,64], index: 1, kind: input, shape index: {}]
  %s2 = inlined_call_operand.vmem [shape: f32[1,64], index: 2, kind: input, shape index: {}]
  %s3 = inlined_call_operand.vmem [shape: f32[64,32], index: 3, kind: output, shape index: {}]
  %s4 = sld [smem:[#allocation0]]
  $region45: #{tpu_custom_call.1} parent=0
    _
  %s6 = ssub.s32 1, %s4
  %s7 = scalar_select 0, %s6, %s4
  loop: start=0, step=1, limit=6
  $region2: #{tpu_custom_call.1} parent=0 // loop_pre_header
    _
  $region3: #{tpu_custom_call.1} parent=0 // loop_header
    %s9 = sphi 0, %s13
    %p10 = scmp.ge.s32.totalorder %s9, 6
    %s19 = sphi 0, %s21
    %s22 = sphi 0, %s19
    %s23 = sphi 0, %s22
    %s39 = sphi 0, %s23
    %s43 = sphi 0, %s43
    %s45 = sphi 0, %s43
    %s46 = sphi 0, %s45
    %s60 = sphi 0, %s46
    %s64 = sphi 0, %s64
    %s66 = sphi 0, %s64
    %s67 = sphi 0, %s66
    %s81 = sphi 0, %s67
    %s87 = sphi 0, %s89
    %s90 = sphi 0, %s87
    %s91 = sphi 0, %s90
    %s107 = sphi 0, %s91
  $region4: #{tpu_custom_call.1} parent=0 // loop_header_branch
    %12 = sbr.rel (%p10) target = $region8
  $region5: #{tpu_custom_call.1} parent=0 // loop_body
    %s14 = ssub.s32 %s9, 1
    %s15 = ssub.s32 %s9, 2
    %s16 = sadd.s32 %s9, 1
    %s17 = ssub.s32 %s9, %s16
    %p18 = scmp.eq.s32.totalorder %s17, 0
    %s20 = sadd.s32 %s19, 1
    %s21 = scalar_select %p18, %s19, %s20
    %p24 = pneg %p18
    %p25 = scmp.eq.s32.totalorder %s9, 3
    %p26 = por %p24, %p25
    %p27 = scmp.ne.s32.totalorder %s19, %s22
    %p28 = scmp.eq.s32.totalorder %s9, 0
    %p29 = por %p27, %p28
    %p30 = scmp.ne.s32.totalorder %s19, %s22
    %p31 = scmp.eq.s32.totalorder %s14, 3
    %p32 = por %p30, %p31
    %p33 = scmp.ne.s32.totalorder %s22, %s23
    %p34 = scmp.eq.s32.totalorder %s14, 0
    %p35 = por %p33, %p34
    %p36 = scmp.ne.s32.totalorder %s22, %s23
    %p37 = scmp.eq.s32.totalorder %s15, 3
    %p38 = por %p36, %p37
    %p40 = scmp.ne.s32.totalorder %s23, %s39
    %p41 = scmp.eq.s32.totalorder %s15, 0
    %p42 = por %p40, %p41
    %s44 = sadd.s32 %s43, 1
    %p47 = scmp.eq.s32.totalorder %s9, 3
    %p48 = scmp.ne.s32.totalorder %s43, %s45
    %p49 = scmp.eq.s32.totalorder %s9, 0
    %p50 = por %p48, %p49
    %p51 = scmp.ne.s32.totalorder %s43, %s45
    %p52 = scmp.eq.s32.totalorder %s14, 3
    %p53 = por %p51, %p52
    %p54 = scmp.ne.s32.totalorder %s45, %s46
    %p55 = scmp.eq.s32.totalorder %s14, 0
    %p56 = por %p54, %p55
    %p57 = scmp.ne.s32.totalorder %s45, %s46
    %p58 = scmp.eq.s32.totalorder %s15, 3
    %p59 = por %p57, %p58
    %p61 = scmp.ne.s32.totalorder %s46, %s60
    %p62 = scmp.eq.s32.totalorder %s15, 0
    %p63 = por %p61, %p62
    %s65 = sadd.s32 %s64, 1
    %p68 = scmp.eq.s32.totalorder %s9, 3
    %p69 = scmp.ne.s32.totalorder %s64, %s66
    %p70 = scmp.eq.s32.totalorder %s9, 0
    %p71 = por %p69, %p70
    %p72 = scmp.ne.s32.totalorder %s64, %s66
    %p73 = scmp.eq.s32.totalorder %s14, 3
    %p74 = por %p72, %p73
    %p75 = scmp.ne.s32.totalorder %s66, %s67
    %p76 = scmp.eq.s32.totalorder %s14, 0
    %p77 = por %p75, %p76
    %p78 = scmp.ne.s32.totalorder %s66, %s67
    %p79 = scmp.eq.s32.totalorder %s15, 3
    %p80 = por %p78, %p79
    %p82 = scmp.ne.s32.totalorder %s67, %s81
    %p83 = scmp.eq.s32.totalorder %s15, 0
    %p84 = por %p82, %p83
    %s85 = ssub.s32 %s9, %s16
    %p86 = scmp.eq.s32.totalorder %s85, 0
    %s88 = sadd.s32 %s87, 1
    %s89 = scalar_select %p86, %s87, %s88
    %p92 = pneg %p86
    %p93 = scmp.eq.s32.totalorder %s9, 3
    %p94 = por %p92, %p93
    %p95 = scmp.ne.s32.totalorder %s87, %s90
    %p96 = scmp.eq.s32.totalorder %s9, 0
    %p97 = por %p95, %p96
    %p98 = scmp.ne.s32.totalorder %s87, %s90
    %p99 = scmp.eq.s32.totalorder %s14, 3
    %p100 = por %p98, %p99
    %p101 = scmp.ne.s32.totalorder %s90, %s91
    %p102 = scmp.eq.s32.totalorder %s14, 0
    %p103 = por %p101, %p102
    %p104 = scmp.ne.s32.totalorder %s90, %s91
    %p105 = scmp.eq.s32.totalorder %s15, 3
    %p106 = por %p104, %p105
    %p108 = scmp.ne.s32.totalorder %s91, %s107
    %p109 = scmp.eq.s32.totalorder %s15, 0
    %p110 = por %p108, %p109
    %p111 = scmp.le.s32.totalorder 1, %s9
    %p112 = scmp.lt.s32.totalorder %s9, 5
    %p113 = pnand %p111, %p112
    %p114 = pneg %p113
    // Predicated region
    $region9: #{tpu_custom_call.1} parent=5 // pred_check
      _
    $region10: #{tpu_custom_call.1} parent=5 // pred_check_branch
      %116 = sbr.rel (%p113) target = $region12
    $region11: #{tpu_custom_call.1} parent=5 // pred_region
      %s117 = ssub.s32 %s9, 1
      // Predicated region
      $region13: #{tpu_custom_call.1} parent=11 // pred_check
        %p118 = pneg %p56
      $region14: #{tpu_custom_call.1} parent=11 // pred_check_branch
        %120 = sbr.rel (%p118) target = $region16
      $region15: #{tpu_custom_call.1} parent=11 // pred_region
        _
      $region16: #{tpu_custom_call.1} parent=11 // pred_fallthru
        _
      // Predicated region
      $region17: #{tpu_custom_call.1} parent=11 // pred_check
        %p121 = pneg %p77
      $region18: #{tpu_custom_call.1} parent=11 // pred_check_branch
        %123 = sbr.rel (%p121) target = $region20
      $region19: #{tpu_custom_call.1} parent=11 // pred_region
        _
      $region20: #{tpu_custom_call.1} parent=11 // pred_fallthru
        _
    $region12: #{tpu_custom_call.1} parent=5 // pred_fallthru
      _
    %p124 = scmp.lt.s32.totalorder %s9, 4
    // Predicated region
    $region21: #{tpu_custom_call.1} parent=5 // pred_check
      %p125 = pneg %p124
    $region22: #{tpu_custom_call.1} parent=5 // pred_check_branch
      %127 = sbr.rel (%p125) target = $region24
    $region23: #{tpu_custom_call.1} parent=5 // pred_region
      // Predicated region
      $region25: #{tpu_custom_call.1} parent=23 // pred_check
        %p128 = pneg %p29
      $region26: #{tpu_custom_call.1} parent=23 // pred_check_branch
        %130 = sbr.rel (%p128) target = $region28
      $region27: #{tpu_custom_call.1} parent=23 // pred_region
        %s131 = smul.u32 2, %s9
        %p132 = scmp.lt.s32.totalorder %s131, 7
        %s133 = scalar_select %p132, %s131, 7
        %s134 = smul.addr %s133, 8
        %s135 = scalar_lea.vmem %s0, %s134
        %s136 = smul.u32 2, %s9
      $region28: #{tpu_custom_call.1} parent=23 // pred_fallthru
        _
    $region24: #{tpu_custom_call.1} parent=5 // pred_fallthru
      _
    %p137 = scmp.le.s32.totalorder 1, %s9
    %p138 = scmp.lt.s32.totalorder %s9, 5
    %p139 = pnand %p137, %p138
    %p140 = pneg %p139
    // Predicated region
    $region29: #{tpu_custom_call.1} parent=5 // pred_check
      _
    $region30: #{tpu_custom_call.1} parent=5 // pred_check_branch
      %142 = sbr.rel (%p139) target = $region32
    $region31: #{tpu_custom_call.1} parent=5 // pred_region
      %s143 = ssub.s32 %s9, 1
      %s144 = smul.u32 2, %s14
      %p145 = scmp.lt.s32.totalorder %s144, 7
      %s146 = scalar_select %p145, %s144, 7
      %s147 = smul.addr %s146, 8
      %s148 = scalar_lea.vmem %s0, %s147
      %p149 = pneg %p35
      %p150 = pneg %p32
      %p151 = pneg %p56
      %p152 = pneg %p53
      %p153 = pneg %p77
      %p154 = pneg %p74
      %p155 = pneg %p103
      %p156 = pneg %p100
      %s157 = smul.u32 2, %s14
      %p158 = scmp.lt.s32.totalorder %s157, 7
      %s159 = scalar_select %p158, %s157, 7
      %s160 = smul.addr %s159, 8
      %s161 = scalar_lea.vmem %s3, %s160
      %s162 = smul.u32 2, %s14
      %p163 = scmp.lt.s32.totalorder %s162, 7
      %s164 = scalar_select %p163, %s162, 7
      %s165 = smul.addr %s164, 8
      %s166 = scalar_lea.vmem %s0, %s165
      %s167 = smul.u32 2, %s14
      %s168 = smul.u32 2, %s14
      %p169 = scmp.lt.s32.totalorder %s168, 7
      %s170 = scalar_select %p169, %s168, 7
      %s171 = smul.addr %s170, 8
      %s172 = scalar_lea.vmem %s3, %s171
      %s173 = smul.u32 2, %s14
      %v174 = vld [vmem:[%s166] sm:$0xff]
      %v175 = vld [vmem:[%s166 + $0x8] sm:$0xff]
      %v176 = vld [vmem:[%s1] sm:$0xff]
      %v177 = vld [vmem:[%s1 + $0x8] sm:$0xff]
      %v178 = vld [vmem:[%s1 + $0x10] sm:$0xff]
      %v179 = vld [vmem:[%s1 + $0x18] sm:$0xff]
      %v180 = vld [vmem:[%s2] sm:$0x1]
      %v182 = vlaneseq
      %v183 = vshrl.u32 %v182, 7
      %v184 = vsub.s32 0, %v183
      %v185 = vrot.slane %v180, %v184
      %vm187 = vcmask 261120
      %v189 = vsel %vm187, %v174, 0
      %v192 = vsel %vm187, %v175, 0
      %194 = vmatprep.subr.mxu0 0.0
      %195 = vmatpush1.msra.mxu0 %v176
      %196 = vmatprep.subr.mxu0 0.0
      %197 = vmatpush1.msra.mxu0 %v177
      %198 = vmatprep.subr.mxu0 0.0
      %199 = vmatpush1.msra.mxu0 %v178
      %200 = vmatprep.subr.mxu0 0.0
      %201 = vmatpush1.msra.mxu0 %v179
      %202 = vmatprep.subr.mxu0 0.0
      %203 = vmatpush1.msra.mxu0 0.0
      %204 = vmatprep.subr.mxu0 0.0
      %205 = vmatpush1.msra.mxu0 0.0
      %206 = vmatprep.subr.mxu0 0.0
      %207 = vmatpush1.msra.mxu0 0.0
      %208 = vmatprep.subr.mxu0 0.0
      %209 = vmatpush1.msra.mxu0 0.0
      %210 = vmatprep.subr.mxu0 0.0
      %211 = vmatpush1.msra.mxu0 0.0
      %212 = vmatprep.subr.mxu0 0.0
      %213 = vmatpush1.msra.mxu0 0.0
      %214 = vmatprep.subr.mxu0 0.0
      %215 = vmatpush1.msra.mxu0 0.0
      %216 = vmatprep.subr.mxu0 0.0
      %217 = vmatpush1.msra.mxu0 0.0
      %218 = vmatprep.subr.mxu0 0.0
      %219 = vmatpush1.msra.mxu0 0.0
      %220 = vmatprep.subr.mxu0 0.0
      %221 = vmatpush1.msra.mxu0 0.0
      %222 = vmatprep.subr.mxu0 0.0
      %223 = vmatpush1.msra.mxu0 0.0
      %224 = vmatprep.subr.mxu0 0.0
      %225 = vmatpush1.msra.mxu0 0.0
      %226 = vmatprep.subr.mxu0 0.0
      %227 = vmatpush1.msra.mxu0 0.0
      %228 = vmatprep.subr.mxu0 0.0
      %229 = vmatpush1.msra.mxu0 0.0
      %230 = vmatprep.subr.mxu0 0.0
      %231 = vmatpush1.msra.mxu0 0.0
      %232 = vmatprep.subr.mxu0 0.0
      %233 = vmatpush1.msra.mxu0 0.0
      %234 = vmatprep.subr.mxu0 0.0
      %235 = vmatpush1.msra.mxu0 0.0
      %236 = vmatprep.subr.mxu0 0.0
      %237 = vmatpush1.msra.mxu0 0.0
      %238 = vmatprep.subr.mxu0 0.0
      %239 = vmatpush1.msra.mxu0 0.0
      %240 = vmatprep.subr.mxu0 0.0
      %241 = vmatpush1.msra.mxu0 0.0
      %242 = vmatprep.subr.mxu0 0.0
      %243 = vmatpush1.msra.mxu0 0.0
      %244 = vmatprep.subr.mxu0 0.0
      %245 = vmatpush1.msra.mxu0 0.0
      %246 = vmatprep.subr.mxu0 0.0
      %247 = vmatpush1.msra.mxu0 0.0
      %248 = vmatprep.subr.mxu0 0.0
      %249 = vmatpush1.msra.mxu0 0.0
      %250 = vmatprep.subr.mxu0 0.0
      %251 = vmatpush1.msra.mxu0 0.0
      %252 = vmatprep.subr.mxu0 0.0
      %253 = vmatpush1.msra.mxu0 0.0
      %254 = vmatprep.subr.mxu0 0.0
      %255 = vmatpush1.msra.mxu0 0.0
      %256 = vmatprep.subr.mxu0 0.0
      %257 = vmatpush1.msra.mxu0 0.0
      %258 = vmatprep.mubr.f32.mxu0 0.0
      %259 = vmatmul.mubr.f32.gmra.mrb[0].mxu0 %v189
      %v260 = vpop.f32.mrb[0].mxu0
      %v261 = vadd.f32 %v185, %v260
      %v262 = vpop.f32.mrb[0].mxu0
      %263 = vmatprep.mubr.f32.mxu0 0.0
      %264 = vmatmul.mubr.f32.gmra.mrb[0].mxu0 %v192
      %v265 = vpop.f32.mrb[0].mxu0
      %v266 = vadd.f32 %v185, %v265
      %v267 = vpop.f32.mrb[0].mxu0
      %268 = vdwg.mxu0
      %v269 = vmax.f32 %v261, 0.0
      %v270 = vmax.f32 %v266, 0.0
      %v271 = vxor.u32 %v261, 2147483648
      %v272 = vxor.u32 %v266, 2147483648
      %v273 = vmul.f32 %v271, 1.442695
      %v274 = vpow.pop %v273
      %v275 = vmul.f32 %v272, 1.442695
      %v276 = vpow.pop %v275
      %v277 = vadd.f32 %v274, 1.0
      %v278 = vadd.f32 %v276, 1.0
      %v279 = vrcp.pop %v277
      %v280 = vmul.f32 1.0, %v279
      %v281 = vrcp.pop %v278
      %v282 = vmul.f32 1.0, %v281
      %v283 = vsub.f32 %v269, %v174
      %v284 = vsub.f32 %v270, %v175
      %287 = vrot.lane.b32.xlu0 %v283, 32
      %v288 = vpop.permute.xlu0 %287
      %289 = vrot.lane.b32.xlu0 %v284, 32
      %v290 = vpop.permute.xlu0 %289
      %v293 = vmul.f32 %v280, %v288
      %v294 = vmul.f32 %v282, %v290
      %297 = vrot.lane.b32.xlu0 %v293, 96
      %v298 = vpop.permute.xlu0 %297
      %299 = vrot.lane.b32.xlu0 %v294, 96
      %v300 = vpop.permute.xlu0 %299
      %v303 = vadd.f32 %v174, %v298
      %v304 = vadd.f32 %v175, %v300
      %305 = vst.msk [vmem:[%s172] sm:$0xff] %vm187, %v303
      %306 = vst.msk [vmem:[%s172 + $0x8] sm:$0xff] %vm187, %v304
      %s307 = smul.u32 2, %s14
      %p308 = scmp.lt.s32.totalorder %s307, 7
      %s309 = scalar_select %p308, %s307, 7
      %s310 = smul.addr %s309, 8
      %s311 = scalar_lea.vmem %s3, %s310
      // Predicated region
      $region33: #{tpu_custom_call.1} parent=31 // pred_check
        %p312 = pneg %p100
      $region34: #{tpu_custom_call.1} parent=31 // pred_check_branch
        %314 = sbr.rel (%p312) target = $region36
      $region35: #{tpu_custom_call.1} parent=31 // pred_region
        %s315 = smul.u32 2, %s14
      $region36: #{tpu_custom_call.1} parent=31 // pred_fallthru
        _
    $region32: #{tpu_custom_call.1} parent=5 // pred_fallthru
      _
    %p316 = scmp.le.s32.totalorder 2, %s9
    // Predicated region
    $region37: #{tpu_custom_call.1} parent=5 // pred_check
      %p317 = pneg %p316
    $region38: #{tpu_custom_call.1} parent=5 // pred_check_branch
      %319 = sbr.rel (%p317) target = $region40
    $region39: #{tpu_custom_call.1} parent=5 // pred_region
      %s320 = ssub.s32 %s9, 2
      // Predicated region
      $region41: #{tpu_custom_call.1} parent=39 // pred_check
        %p321 = pneg %p106
      $region42: #{tpu_custom_call.1} parent=39 // pred_check_branch
        %323 = sbr.rel (%p321) target = $region44
      $region43: #{tpu_custom_call.1} parent=39 // pred_region
        %s324 = smul.u32 2, %s15
        %p325 = scmp.lt.s32.totalorder %s324, 7
        %s326 = scalar_select %p325, %s324, 7
        %s327 = smul.addr %s326, 8
        %s328 = scalar_lea.vmem %s3, %s327
      $region44: #{tpu_custom_call.1} parent=39 // pred_fallthru
        _
    $region40: #{tpu_custom_call.1} parent=5 // pred_fallthru
      _
  $region6: #{tpu_custom_call.1} parent=0 // loop_footer
    %s13 = sadd.s32 1, %s9
  $region7: #{tpu_custom_call.1} parent=0 // loop_footer_branch
    %8 = sbr.rel target = $region3
  $region8: #{tpu_custom_call.1} parent=0 // loop_exit
    _

</llo_original>
